<compile_context>
chip_gen: v7x
topology: tpu7x:2x2x1
jax: 0.10.0
libtpu: 0.0.40
codegen_flags: <defaults>
</compile_context>

<pallas_src>
import functools

import jax
import jax.numpy as jnp
from jax import lax
from jax.experimental import pallas as pl
from jax.experimental.pallas import tpu as pltpu


# ---------------------------------------------------------------------------
# Kernels
# ---------------------------------------------------------------------------

def _hypermlp_kernel(x_ref, w1_ref, s_ref, w2_ref, o_ref, *, eps):
    """Fused forward for one batch tile; W1^T / scaler / W2^T are VMEM-resident."""
    x = x_ref[...].astype(w1_ref.dtype)
    h = jnp.dot(x, w1_ref[...], preferred_element_type=jnp.float32)      # [tb, hidden]
    h = h * s_ref[...]                                                    # folded scaler (f32)
    h = jnp.maximum(h, 0.0) + eps                                         # relu + eps
    out = jnp.dot(h.astype(w2_ref.dtype), w2_ref[...],
                  preferred_element_type=jnp.float32)                     # [tb, out_dim]
    # F.normalize(p=2, dim=-1): out / max(||out||_2, 1e-12)
    sq = jnp.sum(out * out, axis=-1, keepdims=True)
    out = out * lax.rsqrt(jnp.maximum(sq, 1e-24))
    o_ref[...] = out.astype(o_ref.dtype)


def _hypermlp_ktiled_kernel(x_ref, w1_ref, s_ref, w2_ref, o_ref, acc_ref, *, eps):
    """Hidden-tiled variant: used when W1^T/W2^T don't fit VMEM-resident.

    relu(.)+eps is elementwise per hidden unit, so tiling the hidden axis and
    accumulating the second matmul in f32 is exact.
    """
    k = pl.program_id(1)

    @pl.when(k == 0)
    def _():
        acc_ref[...] = jnp.zeros_like(acc_ref)

    x = x_ref[...].astype(w1_ref.dtype)
    h = jnp.dot(x, w1_ref[...], preferred_element_type=jnp.float32)      # [tb, th]
    h = h * s_ref[...]
    h = jnp.maximum(h, 0.0) + eps
    acc_ref[...] += jnp.dot(h.astype(w2_ref.dtype), w2_ref[...],
                            preferred_element_type=jnp.float32)

    @pl.when(k == pl.num_programs(1) - 1)
    def _():
        out = acc_ref[...]
        sq = jnp.sum(out * out, axis=-1, keepdims=True)
        out = out * lax.rsqrt(jnp.maximum(sq, 1e-24))
        o_ref[...] = out.astype(o_ref.dtype)


# ---------------------------------------------------------------------------
# One-time parameter preparation (off the per-call forward path)
# ---------------------------------------------------------------------------

def prepare_hypermlp_params(w1, scaler, w2, *, scaler_init, scaler_scale,
                            compute_dtype=jnp.bfloat16):
    """Transpose weights to matmul layout, cast to the MXU compute dtype, and
    fold the constant forward_scaler (= init/scale) into the scaler vector."""
    hidden, in_dim = w1.shape
    out_dim, hidden2 = w2.shape
    assert hidden2 == hidden and scaler.shape == (hidden,)
    w1_t = jnp.asarray(w1).T.astype(compute_dtype)                 # [in_dim, hidden]
    w2_t = jnp.asarray(w2).T.astype(compute_dtype)                 # [hidden, out_dim]
    s = (jnp.asarray(scaler, jnp.float32)
         * (scaler_init / scaler_scale)).reshape(1, hidden)        # [1, hidden], f32
    return w1_t, s, w2_t


# ---------------------------------------------------------------------------
# VMEM budgeting helpers (generation-aware)
# ---------------------------------------------------------------------------

def _vmem_capacity_bytes():
    try:
        return int(pltpu.get_tpu_info().vmem_capacity_bytes)
    except Exception:
        return 64 * 1024 * 1024   # conservative (v7x per-TC); safe on v5e/v6e too


def _resident_spec(shape):
    """Grid-invariant operand: constant index_map + single buffer (no double
    buffering for a block that never changes)."""
    idx = lambda *_: (0,) * len(shape)
    try:
        return pl.BlockSpec(shape, idx, pipeline_mode=pl.Buffered(1))
    except TypeError:   # very old BlockSpec without pipeline_mode
        return pl.BlockSpec(shape, idx)


def _per_row_bytes(in_dim, hidden, out_dim, x_item, out_item, w_item):
    """Working-set bytes per batch row on the fully-resident path."""
    return (2 * in_dim * x_item          # x tile, double-buffered by the pipeline
            + 2 * out_dim * out_item     # out tile, double-buffered
            + in_dim * w_item            # x cast to compute dtype
            + hidden * 4                 # h (f32)
            + hidden * w_item            # h cast for the second matmul
            + out_dim * 4)               # f32 out before normalize/cast


def _pick_tile_b(batch, in_dim, hidden, out_dim, x_item, out_item, w_item, budget):
    fixed = (in_dim * hidden + hidden * out_dim) * w_item + hidden * 4   # Buffered(1)
    per_row = _per_row_bytes(in_dim, hidden, out_dim, x_item, out_item, w_item)
    avail = budget - fixed
    if avail < 8 * per_row:
        return None                       # weights don't fit -> hidden-tiled path
    tile = min(avail // per_row, 4096, batch)
    if tile >= batch:
        return int(batch)
    return int(max(8, (tile // 8) * 8))


def _pick_tile_h(hidden, in_dim, out_dim, w_item, budget):
    """Largest multiple of 128 that divides hidden and whose double-buffered
    weight/scaler chunks fit the budget."""
    best = 128
    th = 128
    while th <= hidden:
        if hidden % th == 0:
            chunk = 2 * ((in_dim + out_dim) * th * w_item + th * 4)
            if chunk <= budget:
                best = th
        th += 128
    return best


# ---------------------------------------------------------------------------
# Forward wrapper
# ---------------------------------------------------------------------------

def hypermlp_forward(x, w1_t, scaler_folded, w2_t, *, eps=1e-8, tile_b=None,
                     force_k_tiling=False, tile_h=None):
    """x: [B, in_dim]; w1_t: [in_dim, hidden]; scaler_folded: [1, hidden];
    w2_t: [hidden, out_dim].  Returns [B, out_dim] in x.dtype."""
    batch, in_dim = x.shape
    in_dim2, hidden = w1_t.shape
    hidden2, out_dim = w2_t.shape
    assert in_dim2 == in_dim and hidden2 == hidden
    assert scaler_folded.shape == (1, hidden)

    x_item = jnp.dtype(x.dtype).itemsize
    out_item = x_item                      # output dtype follows x (bf16 in -> bf16 out)
    w_item = jnp.dtype(w1_t.dtype).itemsize

    capacity = _vmem_capacity_bytes()
    budget = int(min(0.65 * capacity, 90 * 1024 * 1024))

    flops = 2 * batch * (in_dim * hidden + hidden * out_dim)
    bytes_accessed = (x.size * x_item
                      + (w1_t.size + w2_t.size) * w_item
                      + scaler_folded.size * 4
                      + batch * out_dim * out_item)
    cost = pl.CostEstimate(flops=int(flops), transcendentals=int(batch),
                           bytes_accessed=int(bytes_accessed))

    if tile_b is None:
        picked = _pick_tile_b(batch, in_dim, hidden, out_dim,
                              x_item, out_item, w_item, budget)
    else:
        picked = int(min(int(tile_b), batch))

    use_k_tiling = force_k_tiling or (picked is None)

    if not use_k_tiling:
        tile_b_eff = picked
        # v7x megacore: for large batches keep >=2 tiles so the 2-TC split
        # engages; tiny batches stay single-tile (no per-step overhead).
        if batch >= 2048 and tile_b_eff > batch // 2:
            tile_b_eff = max(8, (((batch + 1) // 2 + 7) // 8) * 8)
        grid = (pl.cdiv(batch, tile_b_eff),)

        fixed = (in_dim * hidden + hidden * out_dim) * w_item + hidden * 4
        per_row = _per_row_bytes(in_dim, hidden, out_dim, x_item, out_item, w_item)
        footprint = fixed + tile_b_eff * per_row
        vmem_limit = int(min(capacity,
                             max(int(footprint * 1.25) + (4 << 20), 32 << 20)))

        kernel = functools.partial(_hypermlp_kernel, eps=eps)
        return pl.pallas_call(
            kernel,
            out_shape=jax.ShapeDtypeStruct((batch, out_dim), x.dtype),
            grid=grid,
            in_specs=[
                pl.BlockSpec((tile_b_eff, in_dim), lambda i: (i, 0)),  # x streamed
                _resident_spec((in_dim, hidden)),                      # W1^T resident, 1 buf
                _resident_spec((1, hidden)),                           # scaler resident, 1 buf
                _resident_spec((hidden, out_dim)),                     # W2^T resident, 1 buf
            ],
            out_specs=pl.BlockSpec((tile_b_eff, out_dim), lambda i: (i, 0)),
            compiler_params=pltpu.CompilerParams(
                dimension_semantics=("parallel",),
                vmem_limit_bytes=vmem_limit),
            cost_estimate=cost,
        )(x, w1_t, scaler_folded, w2_t)

    # ---- hidden-tiled ("K"-tiled) fallback ---------------------------------
    if tile_h is None:
        tile_h = _pick_tile_h(hidden, in_dim, out_dim, w_item, budget // 2)
    tile_h = int(tile_h)
    assert hidden % tile_h == 0 and tile_h % 128 == 0, \
        "hidden-tiled path requires tile_h to be a multiple of 128 dividing hidden"

    if tile_b is None:
        tile_b_eff = min(batch, 1024)
    else:
        tile_b_eff = int(min(int(tile_b), batch))
    tile_b_eff = max(8, tile_b_eff)
    grid = (pl.cdiv(batch, tile_b_eff), hidden // tile_h)

    chunk = 2 * ((in_dim + out_dim) * tile_h * w_item + tile_h * 4)
    per_row_k = (2 * in_dim * x_item + 2 * out_dim * out_item
                 + in_dim * w_item + tile_h * 4 + tile_h * w_item
                 + out_dim * 4          # f32 accumulator scratch
                 + out_dim * 4)         # f32 temp at finalize
    footprint = chunk + tile_b_eff * per_row_k
    vmem_limit = int(min(capacity,
                         max(int(footprint * 1.25) + (4 << 20), 32 << 20)))

    kernel = functools.partial(_hypermlp_ktiled_kernel, eps=eps)
    return pl.pallas_call(
        kernel,
        out_shape=jax.ShapeDtypeStruct((batch, out_dim), x.dtype),
        grid=grid,
        in_specs=[
            pl.BlockSpec((tile_b_eff, in_dim), lambda i, k: (i, 0)),   # x (const over k)
            pl.BlockSpec((in_dim, tile_h), lambda i, k: (0, k)),       # W1^T chunk
            pl.BlockSpec((1, tile_h), lambda i, k: (0, k)),            # scaler chunk
            pl.BlockSpec((tile_h, out_dim), lambda i, k: (k, 0)),      # W2^T chunk
        ],
        out_specs=pl.BlockSpec((tile_b_eff, out_dim), lambda i, k: (i, 0)),
        scratch_shapes=[pltpu.VMEM((tile_b_eff, out_dim), jnp.float32)],
        compiler_params=pltpu.CompilerParams(
            dimension_semantics=("parallel", "arbitrary"),
            vmem_limit_bytes=vmem_limit),
        cost_estimate=cost,
    )(x, w1_t, scaler_folded, w2_t)


# ---------------------------------------------------------------------------
# Demo / self-test
# ---------------------------------------------------------------------------

def _orthogonal(key, rows, cols, dtype=jnp.float32):
    """Deterministic orthogonal init (matches nn.init.orthogonal_ semantics)."""
    n = max(rows, cols)
    a = jax.random.normal(key, (n, min(rows, cols)), dtype=jnp.float32)
    q, r = jnp.linalg.qr(a)
    q = q * jnp.sign(jnp.diag(r))[None, :]
    if rows < cols:
        q = q.T
    return q[:rows, :cols].astype(dtype)


if __name__ == "__main__":
    # Small, lane-dense shapes consistent with the module.
    batch, in_dim, hidden_dim, out_dim = 256, 128, 256, 128
    scaler_init, scaler_scale = 0.5, 2.0
    eps = 1e-8

    key = jax.random.PRNGKey(0)
    kx, kw1, kw2 = jax.random.split(key, 3)

    x = jax.random.normal(kx, (batch, in_dim), dtype=jnp.float32)

    # Parameters, deterministically initialized per HyperMLP.__init__:
    w1 = _orthogonal(kw1, hidden_dim, in_dim)                        # HyperDense(hidden_dim).weight
    scaler = jnp.ones((hidden_dim,), jnp.float32) * scaler_scale     # Scaler param
    w2 = _orthogonal(kw2, out_dim, hidden_dim)                       # HyperDense(out_dim).weight

    # One-time parameter prep (transposes / scaler fold hoisted off the forward path).
    w1_t, s_folded, w2_t = prepare_hypermlp_params(
        w1, scaler, w2, scaler_init=scaler_init, scaler_scale=scaler_scale)

    # Pure-JAX f32 reference for the full HyperMLP forward.
    ref = (x @ w1.T) * (scaler * (scaler_init / scaler_scale))
    ref = jnp.maximum(ref, 0.0) + eps
    ref = ref @ w2.T
    ref = ref / jnp.maximum(jnp.linalg.norm(ref, axis=-1, keepdims=True), 1e-12)

    # Main path: auto tile -> single batch tile (grid=(1,)), weights resident &
    # single-buffered.
    out = jax.block_until_ready(hypermlp_forward(x, w1_t, s_folded, w2_t, eps=eps))
    assert out.shape == (batch, out_dim)
    assert jnp.allclose(out, ref, atol=2e-2, rtol=2e-2), float(
        jnp.max(jnp.abs(out - ref)))

    # Hidden-tiled fallback (used when weights exceed the per-TC VMEM budget,
    # e.g. large hidden on v7x) — exercised here at small shapes so it's known-good.
    out_k = jax.block_until_ready(
        hypermlp_forward(x, w1_t, s_folded, w2_t, eps=eps,
                         force_k_tiling=True, tile_b=128, tile_h=128))
    assert jnp.allclose(out_k, ref, atol=2e-2, rtol=2e-2), float(
        jnp.max(jnp.abs(out_k - ref)))

    print("KERNEL_OK")
</pallas_src>

<mosaic_0001>
module attributes {stable_mosaic.version = 11 : i64} {
  func.func @_hypermlp_kernel(%arg0: i32, %arg1: memref<256x128xf32, #tpu.memory_space<vmem>>, %arg2: memref<128x256xbf16, #tpu.memory_space<vmem>>, %arg3: memref<1x256xf32, #tpu.memory_space<vmem>>, %arg4: memref<256x128xbf16, #tpu.memory_space<vmem>>, %arg5: memref<256x128xf32, #tpu.memory_space<vmem>>) attributes {dimension_semantics = [#tpu.dimension_semantics<parallel>], iteration_bounds = array<i64: 1>, scalar_prefetch = 0 : i64, scratch_operands = 0 : i64, tpu.core_type = #tpu.core_type<tc>, window_params = [{transform_indices = @transform_0, window_bounds = array<i64: 256, 128>}, {pipeline_mode = #tpu.pipeline_mode<synchronous>, transform_indices = @transform_1, window_bounds = array<i64: 128, 256>}, {pipeline_mode = #tpu.pipeline_mode<synchronous>, transform_indices = @transform_2, window_bounds = array<i64: 1, 256>}, {pipeline_mode = #tpu.pipeline_mode<synchronous>, transform_indices = @transform_3, window_bounds = array<i64: 256, 128>}, {transform_indices = @transform_4, window_bounds = array<i64: 256, 128>}]} {
    %c0 = arith.constant 0 : index
    %c0_0 = arith.constant 0 : index
    %0 = vector.load %arg1[%c0, %c0_0] : memref<256x128xf32, #tpu.memory_space<vmem>>, vector<256x128xf32>
    %1 = arith.truncf %0 : vector<256x128xf32> to vector<256x128xbf16>
    %c0_1 = arith.constant 0 : index
    %c0_2 = arith.constant 0 : index
    %2 = vector.load %arg2[%c0_1, %c0_2] : memref<128x256xbf16, #tpu.memory_space<vmem>>, vector<128x256xbf16>
    %cst = arith.constant dense<0.000000e+00> : vector<256x256xf32>
    %3 = tpu.matmul %1, %2, %cst {dimension_numbers = #tpu.dot_dimension_numbers<[1], [0], [0], [1], [0, 0, 1, 1], [], []>} : vector<256x128xbf16>, vector<128x256xbf16>, vector<256x256xf32> -> vector<256x256xf32>
    %c0_3 = arith.constant 0 : index
    %c0_4 = arith.constant 0 : index
    %4 = vector.load %arg3[%c0_3, %c0_4] : memref<1x256xf32, #tpu.memory_space<vmem>>, vector<1x256xf32>
    %5 = vector.broadcast %4 : vector<1x256xf32> to vector<256x256xf32>
    %6 = arith.mulf %3, %5 : vector<256x256xf32>
    %cst_5 = arith.constant 0.000000e+00 : f32
    %7 = vector.broadcast %cst_5 : f32 to vector<256x256xf32>
    %8 = arith.maximumf %6, %7 : vector<256x256xf32>
    %cst_6 = arith.constant 9.99999993E-9 : f32
    %9 = vector.broadcast %cst_6 : f32 to vector<256x256xf32>
    %10 = arith.addf %8, %9 : vector<256x256xf32>
    %11 = arith.truncf %10 : vector<256x256xf32> to vector<256x256xbf16>
    %c0_7 = arith.constant 0 : index
    %c0_8 = arith.constant 0 : index
    %12 = vector.load %arg4[%c0_7, %c0_8] : memref<256x128xbf16, #tpu.memory_space<vmem>>, vector<256x128xbf16>
    %cst_9 = arith.constant dense<0.000000e+00> : vector<256x128xf32>
    %13 = tpu.matmul %11, %12, %cst_9 {dimension_numbers = #tpu.dot_dimension_numbers<[1], [0], [0], [1], [0, 0, 1, 1], [], []>} : vector<256x256xbf16>, vector<256x128xbf16>, vector<256x128xf32> -> vector<256x128xf32>
    %14 = arith.mulf %13, %13 : vector<256x128xf32>
    %cst_10 = arith.constant dense<0.000000e+00> : vector<256xf32>
    %15 = vector.multi_reduction <add>, %14, %cst_10 [1] : vector<256x128xf32> to vector<256xf32>
    %16 = vector.shape_cast %15 : vector<256xf32> to vector<256x1xf32>
    %cst_11 = arith.constant 1.000000e-24 : f32
    %17 = vector.broadcast %cst_11 : f32 to vector<256x1xf32>
    %18 = arith.maximumf %16, %17 : vector<256x1xf32>
    %19 = math.rsqrt %18 : vector<256x1xf32>
    %20 = vector.broadcast %19 : vector<256x1xf32> to vector<256x128xf32>
    %21 = arith.mulf %13, %20 : vector<256x128xf32>
    %c0_12 = arith.constant 0 : index
    %c0_13 = arith.constant 0 : index
    %22 = vector.load %arg5[%c0_12, %c0_13] : memref<256x128xf32, #tpu.memory_space<vmem>>, vector<256x128xf32>
    tpu.vector_store %arg5[%c0_12, %c0_13], %21 {strides = array<i32>} : memref<256x128xf32, #tpu.memory_space<vmem>>, vector<256x128xf32>,
    return
  }
  func.func @transform_0(%arg0: i32) -> (i32, i32) {
    %c0_i32 = arith.constant 0 : i32
    %c0_i32_0 = arith.constant 0 : i32
    return %arg0, %c0_i32 : i32, i32
  }
  func.func @transform_1(%arg0: i32) -> (i32, i32) {
    %c0_i32 = arith.constant 0 : i32
    %c0_i32_0 = arith.constant 0 : i32
    %c0_i32_1 = arith.constant 0 : i32
    return %c0_i32, %c0_i32_0 : i32, i32
  }
  func.func @transform_2(%arg0: i32) -> (i32, i32) {
    %c0_i32 = arith.constant 0 : i32
    %c0_i32_0 = arith.constant 0 : i32
    %c0_i32_1 = arith.constant 0 : i32
    return %c0_i32, %c0_i32_0 : i32, i32
  }
  func.func @transform_3(%arg0: i32) -> (i32, i32) {
    %c0_i32 = arith.constant 0 : i32
    %c0_i32_0 = arith.constant 0 : i32
    %c0_i32_1 = arith.constant 0 : i32
    return %c0_i32, %c0_i32_0 : i32, i32
  }
  func.func @transform_4(%arg0: i32) -> (i32, i32) {
    %c0_i32 = arith.constant 0 : i32
    %c0_i32_0 = arith.constant 0 : i32
    return %arg0, %c0_i32 : i32, i32
  }
}

</mosaic_0001>

<llo_original>
// kernel: tpu_custom_call.1
$region0: #{tpu_custom_call.1}
  #allocation0 [shape = 'u32[]', space=smem, size = 0x4, offset = 0x4, fixed_abs, tag = 'smem constant byte address 0x4 - core index']
  #allocation1 [shape = 'u32[144,128]{1,0:T(1,128)}', space=vmem, size = 0x12000, scoped, tag = 'internal scratch']
  %s0 = inlined_call_operand.hbm [shape: f32[256,128], index: 0, kind: input, shape index: {}]
  %s1 = inlined_call_operand.hbm [shape: bf16[128,256], index: 1, kind: input, shape index: {}]
  %s2 = inlined_call_operand.vmem [shape: f32[1,256], index: 2, kind: input, shape index: {}]
  %s3 = inlined_call_operand.hbm [shape: bf16[256,128], index: 3, kind: input, shape index: {}]
  %s4 = inlined_call_operand.hbm [shape: f32[256,128], index: 4, kind: output, shape index: {}]
  %s5 = sld [smem:[#allocation0]]
  $region38: #{tpu_custom_call.1} parent=0
    _
  %s7 = ssub.s32 1, %s5
  %s8 = scalar_select 0, %s7, %s5
  $region1: #{tpu_custom_call.1} parent=0
    #allocation2 [shape = 'u8[131072]{0}', space=vmem, size = 0x20000, scoped, tag = 'input window, operand 0, single buffered']
    #allocation3 [shape = 's32[1]{0}', space=sflag, size = 0x4, scoped, tag = 'scoped memory for tpu_custom_call.1']
    #allocation4 [shape = 's32[1]{0}', space=sflag, size = 0x4, scoped, tag = 'scoped memory for tpu_custom_call.1']
    #allocation5 [shape = 'u8[65536]{0}', space=vmem, size = 0x10000, scoped, tag = 'input window, operand 1, single buffered']
    #allocation6 [shape = 's32[1]{0}', space=sflag, size = 0x4, scoped, tag = 'scoped memory for tpu_custom_call.1']
    #allocation7 [shape = 'u8[65536]{0}', space=vmem, size = 0x10000, scoped, tag = 'input window, operand 3, single buffered']
    #allocation8 [shape = 'u8[131072]{0}', space=vmem, size = 0x20000, scoped, tag = 'output window, operand 0, single buffered']
    %9 = vsyncpa [#allocation3], 0
    %10 = vsyncpa [#allocation6], 0
    %11 = vsyncpa [#allocation4], 0
    // Predicated region
    $region2: #{tpu_custom_call.1} parent=1 // pred_check
      _
    $region3: #{tpu_custom_call.1} parent=1 // pred_check_branch
      %13 = sbr.rel (0) target = $region5
    $region4: #{tpu_custom_call.1} parent=1 // pred_region
      %s15 = ssub.s32 4096, 4096
      %16 = vsyncadd [#allocation3], %s15
      %s17 = sshll.u32 [#allocation2], 4
      %s18 = int_to_ptr.vmem [resolvable:$true] %s17
      %23 = dma.hbm_to_vmem [thread:$0]  %s0, 4096, %s18, [#allocation3], 128, 128, 8
    $region5: #{tpu_custom_call.1} parent=1 // pred_fallthru
      _
    // Predicated region
    $region6: #{tpu_custom_call.1} parent=1 // pred_check
      _
    $region7: #{tpu_custom_call.1} parent=1 // pred_check_branch
      %25 = sbr.rel (0) target = $region9
    $region8: #{tpu_custom_call.1} parent=1 // pred_region
      %s27 = ssub.s32 2048, 2048
      %28 = vsyncadd [#allocation6], %s27
      %s29 = sshll.u32 [#allocation5], 4
      %s30 = int_to_ptr.vmem [resolvable:$true] %s29
      %35 = dma.hbm_to_vmem [thread:$0]  %s1, 2048, %s30, [#allocation6], 128, 128, 8
    $region9: #{tpu_custom_call.1} parent=1 // pred_fallthru
      _
    // Predicated region
    $region10: #{tpu_custom_call.1} parent=1 // pred_check
      _
    $region11: #{tpu_custom_call.1} parent=1 // pred_check_branch
      %37 = sbr.rel (0) target = $region13
    $region12: #{tpu_custom_call.1} parent=1 // pred_region
      _
    $region13: #{tpu_custom_call.1} parent=1 // pred_fallthru
      _
    // Predicated region
    $region14: #{tpu_custom_call.1} parent=1 // pred_check
      _
    $region15: #{tpu_custom_call.1} parent=1 // pred_check_branch
      %39 = sbr.rel (0) target = $region17
    $region16: #{tpu_custom_call.1} parent=1 // pred_region
      %s41 = ssub.s32 2048, 2048
      %42 = vsyncadd [#allocation6], %s41
      %s43 = sshll.u32 [#allocation7], 4
      %s44 = int_to_ptr.vmem [resolvable:$true] %s43
      %49 = dma.hbm_to_vmem [thread:$0]  %s3, 2048, %s44, [#allocation6], 64, 64, 4
    $region17: #{tpu_custom_call.1} parent=1 // pred_fallthru
      _
    // Predicated region
    $region18: #{tpu_custom_call.1} parent=1 // pred_check
      _
    $region19: #{tpu_custom_call.1} parent=1 // pred_check_branch
      %51 = sbr.rel (0) target = $region21
    $region20: #{tpu_custom_call.1} parent=1 // pred_region
      %52 = dma.done [#allocation3], 4096
    $region21: #{tpu_custom_call.1} parent=1 // pred_fallthru
      _
    // Predicated region
    $region22: #{tpu_custom_call.1} parent=1 // pred_check
      _
    $region23: #{tpu_custom_call.1} parent=1 // pred_check_branch
      %54 = sbr.rel (0) target = $region25
    $region24: #{tpu_custom_call.1} parent=1 // pred_region
      %55 = dma.done [#allocation6], 2048
    $region25: #{tpu_custom_call.1} parent=1 // pred_fallthru
      _
    // Predicated region
    $region26: #{tpu_custom_call.1} parent=1 // pred_check
      _
    $region27: #{tpu_custom_call.1} parent=1 // pred_check_branch
      %57 = sbr.rel (0) target = $region29
    $region28: #{tpu_custom_call.1} parent=1 // pred_region
      %58 = dma.done [#allocation6], 2048
    $region29: #{tpu_custom_call.1} parent=1 // pred_fallthru
      _
    %v60 = vld [vmem:[#allocation2] sm:$0xff]
    %v61 = vld [vmem:[#allocation2 + $0x8] sm:$0xff]
    %v62 = vld [vmem:[#allocation2 + $0x10] sm:$0xff]
    %v63 = vld [vmem:[#allocation2 + $0x18] sm:$0xff]
    %v64 = vld [vmem:[#allocation2 + $0x20] sm:$0xff]
    %v65 = vld [vmem:[#allocation2 + $0x28] sm:$0xff]
    %v66 = vld [vmem:[#allocation2 + $0x30] sm:$0xff]
    %v67 = vld [vmem:[#allocation2 + $0x38] sm:$0xff]
    %v68 = vld [vmem:[#allocation2 + $0x40] sm:$0xff]
    %v69 = vld [vmem:[#allocation2 + $0x48] sm:$0xff]
    %v70 = vld [vmem:[#allocation2 + $0x50] sm:$0xff]
    %v71 = vld [vmem:[#allocation2 + $0x58] sm:$0xff]
    %v72 = vld [vmem:[#allocation2 + $0x60] sm:$0xff]
    %v73 = vld [vmem:[#allocation2 + $0x68] sm:$0xff]
    %v74 = vld [vmem:[#allocation2 + $0x70] sm:$0xff]
    %v75 = vld [vmem:[#allocation2 + $0x78] sm:$0xff]
    %v76 = vld [vmem:[#allocation2 + $0x80] sm:$0xff]
    %v77 = vld [vmem:[#allocation2 + $0x88] sm:$0xff]
    %v78 = vld [vmem:[#allocation2 + $0x90] sm:$0xff]
    %v79 = vld [vmem:[#allocation2 + $0x98] sm:$0xff]
    %v80 = vld [vmem:[#allocation2 + $0xa0] sm:$0xff]
    %v81 = vld [vmem:[#allocation2 + $0xa8] sm:$0xff]
    %v82 = vld [vmem:[#allocation2 + $0xb0] sm:$0xff]
    %v83 = vld [vmem:[#allocation2 + $0xb8] sm:$0xff]
    %v84 = vld [vmem:[#allocation2 + $0xc0] sm:$0xff]
    %v85 = vld [vmem:[#allocation2 + $0xc8] sm:$0xff]
    %v86 = vld [vmem:[#allocation2 + $0xd0] sm:$0xff]
    %v87 = vld [vmem:[#allocation2 + $0xd8] sm:$0xff]
    %v88 = vld [vmem:[#allocation2 + $0xe0] sm:$0xff]
    %v89 = vld [vmem:[#allocation2 + $0xe8] sm:$0xff]
    %v90 = vld [vmem:[#allocation2 + $0xf0] sm:$0xff]
    %v91 = vld [vmem:[#allocation2 + $0xf8] sm:$0xff]
    %v92 = vpack.c.bf16 %v61, %v60
    %v93 = vpack.c.bf16 %v63, %v62
    %v94 = vpack.c.bf16 %v65, %v64
    %v95 = vpack.c.bf16 %v67, %v66
    %v96 = vpack.c.bf16 %v69, %v68
    %v97 = vpack.c.bf16 %v71, %v70
    %v98 = vpack.c.bf16 %v73, %v72
    %v99 = vpack.c.bf16 %v75, %v74
    %v100 = vpack.c.bf16 %v77, %v76
    %v101 = vpack.c.bf16 %v79, %v78
    %v102 = vpack.c.bf16 %v81, %v80
    %v103 = vpack.c.bf16 %v83, %v82
    %v104 = vpack.c.bf16 %v85, %v84
    %v105 = vpack.c.bf16 %v87, %v86
    %v106 = vpack.c.bf16 %v89, %v88
    %v107 = vpack.c.bf16 %v91, %v90
    %v108 = vld [vmem:[#allocation5] sm:$0xff]
    %v109 = vld [vmem:[#allocation5 + $0x8] sm:$0xff]
    %v110 = vld [vmem:[#allocation5 + $0x10] sm:$0xff]
    %v111 = vld [vmem:[#allocation5 + $0x18] sm:$0xff]
    %v112 = vld [vmem:[#allocation5 + $0x20] sm:$0xff]
    %v113 = vld [vmem:[#allocation5 + $0x28] sm:$0xff]
    %v114 = vld [vmem:[#allocation5 + $0x30] sm:$0xff]
    %v115 = vld [vmem:[#allocation5 + $0x38] sm:$0xff]
    %v116 = vld [vmem:[#allocation5 + $0x40] sm:$0xff]
    %v117 = vld [vmem:[#allocation5 + $0x48] sm:$0xff]
    %v118 = vld [vmem:[#allocation5 + $0x50] sm:$0xff]
    %v119 = vld [vmem:[#allocation5 + $0x58] sm:$0xff]
    %v120 = vld [vmem:[#allocation5 + $0x60] sm:$0xff]
    %v121 = vld [vmem:[#allocation5 + $0x68] sm:$0xff]
    %v122 = vld [vmem:[#allocation5 + $0x70] sm:$0xff]
    %v123 = vld [vmem:[#allocation5 + $0x78] sm:$0xff]
    %v140 = vunpack.c.l.b16 %v108
    %v141 = vunpack.c.h.b16 %v108
    %v142 = vunpack.c.l.b16 %v109
    %v143 = vunpack.c.h.b16 %v109
    %v144 = vunpack.c.l.b16 %v110
    %v145 = vunpack.c.h.b16 %v110
    %v146 = vunpack.c.l.b16 %v111
    %v147 = vunpack.c.h.b16 %v111
    %v148 = vunpack.c.l.b16 %v112
    %v149 = vunpack.c.h.b16 %v112
    %v150 = vunpack.c.l.b16 %v113
    %v151 = vunpack.c.h.b16 %v113
    %v152 = vunpack.c.l.b16 %v114
    %v153 = vunpack.c.h.b16 %v114
    %v154 = vunpack.c.l.b16 %v115
    %v155 = vunpack.c.h.b16 %v115
    %v156 = vunpack.c.l.b16 %v116
    %v157 = vunpack.c.h.b16 %v116
    %v158 = vunpack.c.l.b16 %v117
    %v159 = vunpack.c.h.b16 %v117
    %v160 = vunpack.c.l.b16 %v118
    %v161 = vunpack.c.h.b16 %v118
    %v162 = vunpack.c.l.b16 %v119
    %v163 = vunpack.c.h.b16 %v119
    %v164 = vunpack.c.l.b16 %v120
    %v165 = vunpack.c.h.b16 %v120
    %v166 = vunpack.c.l.b16 %v121
    %v167 = vunpack.c.h.b16 %v121
    %v168 = vunpack.c.l.b16 %v122
    %v169 = vunpack.c.h.b16 %v122
    %v170 = vunpack.c.l.b16 %v123
    %v171 = vunpack.c.h.b16 %v123
    %v172 = vpack.c.b16 %v142, %v140
    %v173 = vpack.c.b16 %v143, %v141
    %v174 = vpack.c.b16 %v146, %v144
    %v175 = vpack.c.b16 %v147, %v145
    %v176 = vpack.c.b16 %v150, %v148
    %v177 = vpack.c.b16 %v151, %v149
    %v178 = vpack.c.b16 %v154, %v152
    %v179 = vpack.c.b16 %v155, %v153
    %v180 = vpack.c.b16 %v158, %v156
    %v181 = vpack.c.b16 %v159, %v157
    %v182 = vpack.c.b16 %v162, %v160
    %v183 = vpack.c.b16 %v163, %v161
    %v184 = vpack.c.b16 %v166, %v164
    %v185 = vpack.c.b16 %v167, %v165
    %v186 = vpack.c.b16 %v170, %v168
    %v187 = vpack.c.b16 %v171, %v169
    %204 = vmatprep.subr.bf16.mxu0 %v173
    %205 = vmatpush1.bf16.msra.mxu0 %v172
    %206 = vmatprep.subr.bf16.mxu0 %v175
    %207 = vmatpush1.bf16.msra.mxu0 %v174
    %208 = vmatprep.subr.bf16.mxu0 %v177
    %209 = vmatpush1.bf16.msra.mxu0 %v176
    %210 = vmatprep.subr.bf16.mxu0 %v179
    %211 = vmatpush1.bf16.msra.mxu0 %v178
    %212 = vmatprep.subr.bf16.mxu0 %v181
    %213 = vmatpush1.bf16.msra.mxu0 %v180
    %214 = vmatprep.subr.bf16.mxu0 %v183
    %215 = vmatpush1.bf16.msra.mxu0 %v182
    %216 = vmatprep.subr.bf16.mxu0 %v185
    %217 = vmatpush1.bf16.msra.mxu0 %v184
    %218 = vmatprep.subr.bf16.mxu0 %v187
    %219 = vmatpush1.bf16.msra.mxu0 %v186
    %220 = vmatprep.subr.bf16.mxu0 0
    %221 = vmatpush1.bf16.msra.mxu0 0
    %222 = vmatprep.subr.bf16.mxu0 0
    %223 = vmatpush1.bf16.msra.mxu0 0
    %224 = vmatprep.subr.bf16.mxu0 0
    %225 = vmatpush1.bf16.msra.mxu0 0
    %226 = vmatprep.subr.bf16.mxu0 0
    %227 = vmatpush1.bf16.msra.mxu0 0
    %228 = vmatprep.subr.bf16.mxu0 0
    %229 = vmatpush1.bf16.msra.mxu0 0
    %230 = vmatprep.subr.bf16.mxu0 0
    %231 = vmatpush1.bf16.msra.mxu0 0
    %232 = vmatprep.subr.bf16.mxu0 0
    %233 = vmatpush1.bf16.msra.mxu0 0
    %234 = vmatprep.subr.bf16.mxu0 0
    %235 = vmatpush1.bf16.msra.mxu0 0
    %236 = vmatprep.mubr.bf16.mxu0 0
    %237 = vmatmul.mubr.bf16.gmra.mrb[0].mxu0 %v92
    %v238 = vpop.f32.mrb[0].mxu0
    %v239 = vadd.f32 0.0, %v238
    %v240 = vpop.f32.mrb[0].mxu0
    %v241 = vadd.f32 0.0, %v240
    %v242 = vpop.f32.mrb[0].mxu0
    %v243 = vadd.f32 0.0, %v242
    %v244 = vpop.f32.mrb[0].mxu0
    %v245 = vadd.f32 0.0, %v244
    %246 = vmatprep.mubr.bf16.mxu0 0
    %247 = vmatmul.mubr.bf16.gmra.mrb[0].mxu0 %v93
    %v248 = vpop.f32.mrb[0].mxu0
    %v249 = vadd.f32 0.0, %v248
    %v250 = vpop.f32.mrb[0].mxu0
    %v251 = vadd.f32 0.0, %v250
    %v252 = vpop.f32.mrb[0].mxu0
    %v253 = vadd.f32 0.0, %v252
    %v254 = vpop.f32.mrb[0].mxu0
    %v255 = vadd.f32 0.0, %v254
    %256 = vmatprep.mubr.bf16.mxu0 0
    %257 = vmatmul.mubr.bf16.gmra.mrb[0].mxu0 %v94
    %v258 = vpop.f32.mrb[0].mxu0
    %v259 = vadd.f32 0.0, %v258
    %v260 = vpop.f32.mrb[0].mxu0
    %v261 = vadd.f32 0.0, %v260
    %v262 = vpop.f32.mrb[0].mxu0
    %v263 = vadd.f32 0.0, %v262
    %v264 = vpop.f32.mrb[0].mxu0
    %v265 = vadd.f32 0.0, %v264
    %266 = vmatprep.mubr.bf16.mxu0 0
    %267 = vmatmul.mubr.bf16.gmra.mrb[0].mxu0 %v95
    %v268 = vpop.f32.mrb[0].mxu0
    %v269 = vadd.f32 0.0, %v268
    %v270 = vpop.f32.mrb[0].mxu0
    %v271 = vadd.f32 0.0, %v270
    %v272 = vpop.f32.mrb[0].mxu0
    %v273 = vadd.f32 0.0, %v272
    %v274 = vpop.f32.mrb[0].mxu0
    %v275 = vadd.f32 0.0, %v274
    %276 = vmatprep.mubr.bf16.mxu0 0
    %277 = vmatmul.mubr.bf16.gmra.mrb[0].mxu0 %v96
    %v278 = vpop.f32.mrb[0].mxu0
    %v279 = vadd.f32 0.0, %v278
    %v280 = vpop.f32.mrb[0].mxu0
    %v281 = vadd.f32 0.0, %v280
    %v282 = vpop.f32.mrb[0].mxu0
    %v283 = vadd.f32 0.0, %v282
    %v284 = vpop.f32.mrb[0].mxu0
    %v285 = vadd.f32 0.0, %v284
    %286 = vmatprep.mubr.bf16.mxu0 0
    %287 = vmatmul.mubr.bf16.gmra.mrb[0].mxu0 %v97
    %v288 = vpop.f32.mrb[0].mxu0
    %v289 = vadd.f32 0.0, %v288
    %v290 = vpop.f32.mrb[0].mxu0
    %v291 = vadd.f32 0.0, %v290
    %v292 = vpop.f32.mrb[0].mxu0
    %v293 = vadd.f32 0.0, %v292
    %v294 = vpop.f32.mrb[0].mxu0
    %v295 = vadd.f32 0.0, %v294
    %296 = vmatprep.mubr.bf16.mxu0 0
    %297 = vmatmul.mubr.bf16.gmra.mrb[0].mxu0 %v98
    %v298 = vpop.f32.mrb[0].mxu0
    %v299 = vadd.f32 0.0, %v298
    %v300 = vpop.f32.mrb[0].mxu0
    %v301 = vadd.f32 0.0, %v300
    %v302 = vpop.f32.mrb[0].mxu0
    %v303 = vadd.f32 0.0, %v302
    %v304 = vpop.f32.mrb[0].mxu0
    %v305 = vadd.f32 0.0, %v304
    %306 = vmatprep.mubr.bf16.mxu0 0
    %307 = vmatmul.mubr.bf16.gmra.mrb[0].mxu0 %v99
    %v308 = vpop.f32.mrb[0].mxu0
    %v309 = vadd.f32 0.0, %v308
    %v310 = vpop.f32.mrb[0].mxu0
    %v311 = vadd.f32 0.0, %v310
    %v312 = vpop.f32.mrb[0].mxu0
    %v313 = vadd.f32 0.0, %v312
    %v314 = vpop.f32.mrb[0].mxu0
    %v315 = vadd.f32 0.0, %v314
    %316 = vmatprep.mubr.bf16.mxu0 0
    %317 = vmatmul.mubr.bf16.gmra.mrb[0].mxu0 %v100
    %v318 = vpop.f32.mrb[0].mxu0
    %v319 = vadd.f32 0.0, %v318
    %v320 = vpop.f32.mrb[0].mxu0
    %v321 = vadd.f32 0.0, %v320
    %v322 = vpop.f32.mrb[0].mxu0
    %v323 = vadd.f32 0.0, %v322
    %v324 = vpop.f32.mrb[0].mxu0
    %v325 = vadd.f32 0.0, %v324
    %326 = vmatprep.mubr.bf16.mxu0 0
    %327 = vmatmul.mubr.bf16.gmra.mrb[0].mxu0 %v101
    %v328 = vpop.f32.mrb[0].mxu0
    %v329 = vadd.f32 0.0, %v328
    %v330 = vpop.f32.mrb[0].mxu0
    %v331 = vadd.f32 0.0, %v330
    %v332 = vpop.f32.mrb[0].mxu0
    %v333 = vadd.f32 0.0, %v332
    %v334 = vpop.f32.mrb[0].mxu0
    %v335 = vadd.f32 0.0, %v334
    %336 = vmatprep.mubr.bf16.mxu0 0
    %337 = vmatmul.mubr.bf16.gmra.mrb[0].mxu0 %v102
    %v338 = vpop.f32.mrb[0].mxu0
    %v339 = vadd.f32 0.0, %v338
    %v340 = vpop.f32.mrb[0].mxu0
    %v341 = vadd.f32 0.0, %v340
    %v342 = vpop.f32.mrb[0].mxu0
    %v343 = vadd.f32 0.0, %v342
    %v344 = vpop.f32.mrb[0].mxu0
    %v345 = vadd.f32 0.0, %v344
    %346 = vmatprep.mubr.bf16.mxu0 0
    %347 = vmatmul.mubr.bf16.gmra.mrb[0].mxu0 %v103
    %v348 = vpop.f32.mrb[0].mxu0
    %v349 = vadd.f32 0.0, %v348
    %v350 = vpop.f32.mrb[0].mxu0
    %v351 = vadd.f32 0.0, %v350
    %v352 = vpop.f32.mrb[0].mxu0
    %v353 = vadd.f32 0.0, %v352
    %v354 = vpop.f32.mrb[0].mxu0
    %v355 = vadd.f32 0.0, %v354
    %356 = vmatprep.mubr.bf16.mxu0 0
    %357 = vmatmul.mubr.bf16.gmra.mrb[0].mxu0 %v104
    %v358 = vpop.f32.mrb[0].mxu0
    %v359 = vadd.f32 0.0, %v358
    %v360 = vpop.f32.mrb[0].mxu0
    %v361 = vadd.f32 0.0, %v360
    %v362 = vpop.f32.mrb[0].mxu0
    %v363 = vadd.f32 0.0, %v362
    %v364 = vpop.f32.mrb[0].mxu0
    %v365 = vadd.f32 0.0, %v364
    %366 = vmatprep.mubr.bf16.mxu0 0
    %367 = vmatmul.mubr.bf16.gmra.mrb[0].mxu0 %v105
    %v368 = vpop.f32.mrb[0].mxu0
    %v369 = vadd.f32 0.0, %v368
    %v370 = vpop.f32.mrb[0].mxu0
    %v371 = vadd.f32 0.0, %v370
    %v372 = vpop.f32.mrb[0].mxu0
    %v373 = vadd.f32 0.0, %v372
    %v374 = vpop.f32.mrb[0].mxu0
    %v375 = vadd.f32 0.0, %v374
    %376 = vmatprep.mubr.bf16.mxu0 0
    %377 = vmatmul.mubr.bf16.gmra.mrb[0].mxu0 %v106
    %v378 = vpop.f32.mrb[0].mxu0
    %v379 = vadd.f32 0.0, %v378
    %v380 = vpop.f32.mrb[0].mxu0
    %v381 = vadd.f32 0.0, %v380
    %v382 = vpop.f32.mrb[0].mxu0
    %v383 = vadd.f32 0.0, %v382
    %v384 = vpop.f32.mrb[0].mxu0
    %v385 = vadd.f32 0.0, %v384
    %386 = vmatprep.mubr.bf16.mxu0 0
    %387 = vmatmul.mubr.bf16.gmra.mrb[0].mxu0 %v107
    %v388 = vpop.f32.mrb[0].mxu0
    %v389 = vadd.f32 0.0, %v388
    %v390 = vpop.f32.mrb[0].mxu0
    %v391 = vadd.f32 0.0, %v390
    %v392 = vpop.f32.mrb[0].mxu0
    %v393 = vadd.f32 0.0, %v392
    %v394 = vpop.f32.mrb[0].mxu0
    %v395 = vadd.f32 0.0, %v394
    %396 = vdwg.mxu0
    %v397 = vld [vmem:[%s2] sm:$0x3]
    %v399 = vlaneseq
    %v400 = vshrl.u32 %v399, 7
    %v401 = vsub.s32 0, %v400
    %v402 = vrot.slane %v397, %v401
    %v403 = vlaneseq
    %v404 = vshrl.u32 %v403, 7
    %v405 = vsub.s32 1, %v404
    %v406 = vrot.slane %v397, %v405
    %v409 = vmul.f32 %v239, %v402
    %v410 = vmul.f32 %v241, %v406
    %v411 = vmul.f32 %v243, %v402
    %v412 = vmul.f32 %v245, %v406
    %v413 = vmul.f32 %v249, %v402
    %v414 = vmul.f32 %v251, %v406
    %v415 = vmul.f32 %v253, %v402
    %v416 = vmul.f32 %v255, %v406
    %v417 = vmul.f32 %v259, %v402
    %v418 = vmul.f32 %v261, %v406
    %v419 = vmul.f32 %v263, %v402
    %v420 = vmul.f32 %v265, %v406
    %v421 = vmul.f32 %v269, %v402
    %v422 = vmul.f32 %v271, %v406
    %v423 = vmul.f32 %v273, %v402
    %v424 = vmul.f32 %v275, %v406
    %v425 = vmul.f32 %v279, %v402
    %v426 = vmul.f32 %v281, %v406
    %v427 = vmul.f32 %v283, %v402
    %v428 = vmul.f32 %v285, %v406
    %v429 = vmul.f32 %v289, %v402
    %v430 = vmul.f32 %v291, %v406
    %v431 = vmul.f32 %v293, %v402
    %v432 = vmul.f32 %v295, %v406
    %v433 = vmul.f32 %v299, %v402
    %v434 = vmul.f32 %v301, %v406
    %v435 = vmul.f32 %v303, %v402
    %v436 = vmul.f32 %v305, %v406
    %v437 = vmul.f32 %v309, %v402
    %v438 = vmul.f32 %v311, %v406
    %v439 = vmul.f32 %v313, %v402
    %v440 = vmul.f32 %v315, %v406
    %v441 = vmul.f32 %v319, %v402
    %v442 = vmul.f32 %v321, %v406
    %v443 = vmul.f32 %v323, %v402
    %v444 = vmul.f32 %v325, %v406
    %v445 = vmul.f32 %v329, %v402
    %v446 = vmul.f32 %v331, %v406
    %v447 = vmul.f32 %v333, %v402
    %v448 = vmul.f32 %v335, %v406
    %v449 = vmul.f32 %v339, %v402
    %v450 = vmul.f32 %v341, %v406
    %v451 = vmul.f32 %v343, %v402
    %v452 = vmul.f32 %v345, %v406
    %v453 = vmul.f32 %v349, %v402
    %v454 = vmul.f32 %v351, %v406
    %v455 = vmul.f32 %v353, %v402
    %v456 = vmul.f32 %v355, %v406
    %v457 = vmul.f32 %v359, %v402
    %v458 = vmul.f32 %v361, %v406
    %v459 = vmul.f32 %v363, %v402
    %v460 = vmul.f32 %v365, %v406
    %v461 = vmul.f32 %v369, %v402
    %v462 = vmul.f32 %v371, %v406
    %v463 = vmul.f32 %v373, %v402
    %v464 = vmul.f32 %v375, %v406
    %v465 = vmul.f32 %v379, %v402
    %v466 = vmul.f32 %v381, %v406
    %v467 = vmul.f32 %v383, %v402
    %v468 = vmul.f32 %v385, %v406
    %v469 = vmul.f32 %v389, %v402
    %v470 = vmul.f32 %v391, %v406
    %v471 = vmul.f32 %v393, %v402
    %v472 = vmul.f32 %v395, %v406
    %v473 = vmax.f32 %v409, 0.0
    %v474 = vmax.f32 %v410, 0.0
    %v475 = vmax.f32 %v411, 0.0
    %v476 = vmax.f32 %v412, 0.0
    %v477 = vmax.f32 %v413, 0.0
    %v478 = vmax.f32 %v414, 0.0
    %v479 = vmax.f32 %v415, 0.0
    %v480 = vmax.f32 %v416, 0.0
    %v481 = vmax.f32 %v417, 0.0
    %v482 = vmax.f32 %v418, 0.0
    %v483 = vmax.f32 %v419, 0.0
    %v484 = vmax.f32 %v420, 0.0
    %v485 = vmax.f32 %v421, 0.0
    %v486 = vmax.f32 %v422, 0.0
    %v487 = vmax.f32 %v423, 0.0
    %v488 = vmax.f32 %v424, 0.0
    %v489 = vmax.f32 %v425, 0.0
    %v490 = vmax.f32 %v426, 0.0
    %v491 = vmax.f32 %v427, 0.0
    %v492 = vmax.f32 %v428, 0.0
    %v493 = vmax.f32 %v429, 0.0
    %v494 = vmax.f32 %v430, 0.0
    %v495 = vmax.f32 %v431, 0.0
    %v496 = vmax.f32 %v432, 0.0
    %v497 = vmax.f32 %v433, 0.0
    %v498 = vmax.f32 %v434, 0.0
    %v499 = vmax.f32 %v435, 0.0
    %v500 = vmax.f32 %v436, 0.0
    %v501 = vmax.f32 %v437, 0.0
    %v502 = vmax.f32 %v438, 0.0
    %v503 = vmax.f32 %v439, 0.0
    %v504 = vmax.f32 %v440, 0.0
    %v505 = vmax.f32 %v441, 0.0
    %v506 = vmax.f32 %v442, 0.0
    %v507 = vmax.f32 %v443, 0.0
    %v508 = vmax.f32 %v444, 0.0
    %v509 = vmax.f32 %v445, 0.0
    %v510 = vmax.f32 %v446, 0.0
    %v511 = vmax.f32 %v447, 0.0
    %v512 = vmax.f32 %v448, 0.0
    %v513 = vmax.f32 %v449, 0.0
    %v514 = vmax.f32 %v450, 0.0
    %v515 = vmax.f32 %v451, 0.0
    %v516 = vmax.f32 %v452, 0.0
    %v517 = vmax.f32 %v453, 0.0
    %v518 = vmax.f32 %v454, 0.0
    %v519 = vmax.f32 %v455, 0.0
    %v520 = vmax.f32 %v456, 0.0
    %v521 = vmax.f32 %v457, 0.0
    %v522 = vmax.f32 %v458, 0.0
    %v523 = vmax.f32 %v459, 0.0
    %v524 = vmax.f32 %v460, 0.0
    %v525 = vmax.f32 %v461, 0.0
    %v526 = vmax.f32 %v462, 0.0
    %v527 = vmax.f32 %v463, 0.0
    %v528 = vmax.f32 %v464, 0.0
    %v529 = vmax.f32 %v465, 0.0
    %v530 = vmax.f32 %v466, 0.0
    %v531 = vmax.f32 %v467, 0.0
    %v532 = vmax.f32 %v468, 0.0
    %v533 = vmax.f32 %v469, 0.0
    %v534 = vmax.f32 %v470, 0.0
    %v535 = vmax.f32 %v471, 0.0
    %v536 = vmax.f32 %v472, 0.0
    %v537 = vadd.f32 %v473, 1e-08
    %v538 = vadd.f32 %v474, 1e-08
    %v539 = vadd.f32 %v475, 1e-08
    %v540 = vadd.f32 %v476, 1e-08
    %v541 = vadd.f32 %v477, 1e-08
    %v542 = vadd.f32 %v478, 1e-08
    %v543 = vadd.f32 %v479, 1e-08
    %v544 = vadd.f32 %v480, 1e-08
    %v545 = vadd.f32 %v481, 1e-08
    %v546 = vadd.f32 %v482, 1e-08
    %v547 = vadd.f32 %v483, 1e-08
    %v548 = vadd.f32 %v484, 1e-08
    %v549 = vadd.f32 %v485, 1e-08
    %v550 = vadd.f32 %v486, 1e-08
    %v551 = vadd.f32 %v487, 1e-08
    %v552 = vadd.f32 %v488, 1e-08
    %v553 = vadd.f32 %v489, 1e-08
    %v554 = vadd.f32 %v490, 1e-08
    %v555 = vadd.f32 %v491, 1e-08
    %v556 = vadd.f32 %v492, 1e-08
    %v557 = vadd.f32 %v493, 1e-08
    %v558 = vadd.f32 %v494, 1e-08
    %v559 = vadd.f32 %v495, 1e-08
    %v560 = vadd.f32 %v496, 1e-08
    %v561 = vadd.f32 %v497, 1e-08
    %v562 = vadd.f32 %v498, 1e-08
    %v563 = vadd.f32 %v499, 1e-08
    %v564 = vadd.f32 %v500, 1e-08
    %v565 = vadd.f32 %v501, 1e-08
    %v566 = vadd.f32 %v502, 1e-08
    %v567 = vadd.f32 %v503, 1e-08
    %v568 = vadd.f32 %v504, 1e-08
    %v569 = vadd.f32 %v505, 1e-08
    %v570 = vadd.f32 %v506, 1e-08
    %v571 = vadd.f32 %v507, 1e-08
    %v572 = vadd.f32 %v508, 1e-08
    %v573 = vadd.f32 %v509, 1e-08
    %v574 = vadd.f32 %v510, 1e-08
    %v575 = vadd.f32 %v511, 1e-08
    %v576 = vadd.f32 %v512, 1e-08
    %v577 = vadd.f32 %v513, 1e-08
    %v578 = vadd.f32 %v514, 1e-08
    %v579 = vadd.f32 %v515, 1e-08
    %v580 = vadd.f32 %v516, 1e-08
    %v581 = vadd.f32 %v517, 1e-08
    %v582 = vadd.f32 %v518, 1e-08
    %v583 = vadd.f32 %v519, 1e-08
    %v584 = vadd.f32 %v520, 1e-08
    %v585 = vadd.f32 %v521, 1e-08
    %v586 = vadd.f32 %v522, 1e-08
    %v587 = vadd.f32 %v523, 1e-08
    %v588 = vadd.f32 %v524, 1e-08
    %v589 = vadd.f32 %v525, 1e-08
    %v590 = vadd.f32 %v526, 1e-08
    %v591 = vadd.f32 %v527, 1e-08
    %v592 = vadd.f32 %v528, 1e-08
    %v593 = vadd.f32 %v529, 1e-08
    %v594 = vadd.f32 %v530, 1e-08
    %v595 = vadd.f32 %v531, 1e-08
    %v596 = vadd.f32 %v532, 1e-08
    %v597 = vadd.f32 %v533, 1e-08
    %v598 = vadd.f32 %v534, 1e-08
    %v599 = vadd.f32 %v535, 1e-08
    %v600 = vadd.f32 %v536, 1e-08
    %v601 = vpack.c.bf16 %v539, %v537
    %v602 = vpack.c.bf16 %v540, %v538
    %v603 = vpack.c.bf16 %v543, %v541
    %v604 = vpack.c.bf16 %v544, %v542
    %v605 = vpack.c.bf16 %v547, %v545
    %v606 = vpack.c.bf16 %v548, %v546
    %v607 = vpack.c.bf16 %v551, %v549
    %v608 = vpack.c.bf16 %v552, %v550
    %v609 = vpack.c.bf16 %v555, %v553
    %v610 = vpack.c.bf16 %v556, %v554
    %v611 = vpack.c.bf16 %v559, %v557
    %v612 = vpack.c.bf16 %v560, %v558
    %v613 = vpack.c.bf16 %v563, %v561
    %v614 = vpack.c.bf16 %v564, %v562
    %v615 = vpack.c.bf16 %v567, %v565
    %v616 = vpack.c.bf16 %v568, %v566
    %v617 = vpack.c.bf16 %v571, %v569
    %v618 = vpack.c.bf16 %v572, %v570
    %v619 = vpack.c.bf16 %v575, %v573
    %v620 = vpack.c.bf16 %v576, %v574
    %v621 = vpack.c.bf16 %v579, %v577
    %v622 = vpack.c.bf16 %v580, %v578
    %v623 = vpack.c.bf16 %v583, %v581
    %v624 = vpack.c.bf16 %v584, %v582
    %v625 = vpack.c.bf16 %v587, %v585
    %v626 = vpack.c.bf16 %v588, %v586
    %v627 = vpack.c.bf16 %v591, %v589
    %v628 = vpack.c.bf16 %v592, %v590
    %v629 = vpack.c.bf16 %v595, %v593
    %v630 = vpack.c.bf16 %v596, %v594
    %v631 = vpack.c.bf16 %v599, %v597
    %v632 = vpack.c.bf16 %v600, %v598
    %v633 = vld [vmem:[#allocation7] sm:$0xf]
    %v634 = vld [vmem:[#allocation7 + $0x4] sm:$0xf]
    %v635 = vld [vmem:[#allocation7 + $0x8] sm:$0xf]
    %v636 = vld [vmem:[#allocation7 + $0xc] sm:$0xf]
    %v637 = vld [vmem:[#allocation7 + $0x10] sm:$0xf]
    %v638 = vld [vmem:[#allocation7 + $0x14] sm:$0xf]
    %v639 = vld [vmem:[#allocation7 + $0x18] sm:$0xf]
    %v640 = vld [vmem:[#allocation7 + $0x1c] sm:$0xf]
    %v641 = vld [vmem:[#allocation7 + $0x20] sm:$0xf]
    %v642 = vld [vmem:[#allocation7 + $0x24] sm:$0xf]
    %v643 = vld [vmem:[#allocation7 + $0x28] sm:$0xf]
    %v644 = vld [vmem:[#allocation7 + $0x2c] sm:$0xf]
    %v645 = vld [vmem:[#allocation7 + $0x30] sm:$0xf]
    %v646 = vld [vmem:[#allocation7 + $0x34] sm:$0xf]
    %v647 = vld [vmem:[#allocation7 + $0x38] sm:$0xf]
    %v648 = vld [vmem:[#allocation7 + $0x3c] sm:$0xf]
    %v649 = vld [vmem:[#allocation7 + $0x40] sm:$0xf]
    %v650 = vld [vmem:[#allocation7 + $0x44] sm:$0xf]
    %v651 = vld [vmem:[#allocation7 + $0x48] sm:$0xf]
    %v652 = vld [vmem:[#allocation7 + $0x4c] sm:$0xf]
    %v653 = vld [vmem:[#allocation7 + $0x50] sm:$0xf]
    %v654 = vld [vmem:[#allocation7 + $0x54] sm:$0xf]
    %v655 = vld [vmem:[#allocation7 + $0x58] sm:$0xf]
    %v656 = vld [vmem:[#allocation7 + $0x5c] sm:$0xf]
    %v657 = vld [vmem:[#allocation7 + $0x60] sm:$0xf]
    %v658 = vld [vmem:[#allocation7 + $0x64] sm:$0xf]
    %v659 = vld [vmem:[#allocation7 + $0x68] sm:$0xf]
    %v660 = vld [vmem:[#allocation7 + $0x6c] sm:$0xf]
    %v661 = vld [vmem:[#allocation7 + $0x70] sm:$0xf]
    %v662 = vld [vmem:[#allocation7 + $0x74] sm:$0xf]
    %v663 = vld [vmem:[#allocation7 + $0x78] sm:$0xf]
    %v664 = vld [vmem:[#allocation7 + $0x7c] sm:$0xf]
    %v697 = vunpack.c.l.b16 %v633
    %v698 = vunpack.c.l.b16 %v634
    %v699 = vunpack.c.l.b16 %v635
    %v700 = vunpack.c.l.b16 %v636
    %v701 = vunpack.c.l.b16 %v637
    %v702 = vunpack.c.l.b16 %v638
    %v703 = vunpack.c.l.b16 %v639
    %v704 = vunpack.c.l.b16 %v640
    %v705 = vunpack.c.l.b16 %v641
    %v706 = vunpack.c.l.b16 %v642
    %v707 = vunpack.c.l.b16 %v643
    %v708 = vunpack.c.l.b16 %v644
    %v709 = vunpack.c.l.b16 %v645
    %v710 = vunpack.c.l.b16 %v646
    %v711 = vunpack.c.l.b16 %v647
    %v712 = vunpack.c.l.b16 %v648
    %v713 = vunpack.c.l.b16 %v649
    %v714 = vunpack.c.l.b16 %v650
    %v715 = vunpack.c.l.b16 %v651
    %v716 = vunpack.c.l.b16 %v652
    %v717 = vunpack.c.l.b16 %v653
    %v718 = vunpack.c.l.b16 %v654
    %v719 = vunpack.c.l.b16 %v655
    %v720 = vunpack.c.l.b16 %v656
    %v721 = vunpack.c.l.b16 %v657
    %v722 = vunpack.c.l.b16 %v658
    %v723 = vunpack.c.l.b16 %v659
    %v724 = vunpack.c.l.b16 %v660
    %v725 = vunpack.c.l.b16 %v661
    %v726 = vunpack.c.l.b16 %v662
    %v727 = vunpack.c.l.b16 %v663
    %v728 = vunpack.c.l.b16 %v664
    %v729 = vpack.c.b16 %v698, %v697
    %v730 = vpack.c.b16 %v700, %v699
    %v731 = vpack.c.b16 %v702, %v701
    %v732 = vpack.c.b16 %v704, %v703
    %v733 = vpack.c.b16 %v706, %v705
    %v734 = vpack.c.b16 %v708, %v707
    %v735 = vpack.c.b16 %v710, %v709
    %v736 = vpack.c.b16 %v712, %v711
    %v737 = vpack.c.b16 %v714, %v713
    %v738 = vpack.c.b16 %v716, %v715
    %v739 = vpack.c.b16 %v718, %v717
    %v740 = vpack.c.b16 %v720, %v719
    %v741 = vpack.c.b16 %v722, %v721
    %v742 = vpack.c.b16 %v724, %v723
    %v743 = vpack.c.b16 %v726, %v725
    %v744 = vpack.c.b16 %v728, %v727
    %761 = vmatprep.subr.bf16.mxu0 0
    %762 = vmatpush1.bf16.msra.mxu0 %v729
    %763 = vmatprep.subr.bf16.mxu0 0
    %764 = vmatpush1.bf16.msra.mxu0 %v730
    %765 = vmatprep.subr.bf16.mxu0 0
    %766 = vmatpush1.bf16.msra.mxu0 %v731
    %767 = vmatprep.subr.bf16.mxu0 0
    %768 = vmatpush1.bf16.msra.mxu0 %v732
    %769 = vmatprep.subr.bf16.mxu0 0
    %770 = vmatpush1.bf16.msra.mxu0 %v733
    %771 = vmatprep.subr.bf16.mxu0 0
    %772 = vmatpush1.bf16.msra.mxu0 %v734
    %773 = vmatprep.subr.bf16.mxu0 0
    %774 = vmatpush1.bf16.msra.mxu0 %v735
    %775 = vmatprep.subr.bf16.mxu0 0
    %776 = vmatpush1.bf16.msra.mxu0 %v736
    %777 = vmatprep.subr.bf16.mxu0 0
    %778 = vmatpush1.bf16.msra.mxu0 %v737
    %779 = vmatprep.subr.bf16.mxu0 0
    %780 = vmatpush1.bf16.msra.mxu0 %v738
    %781 = vmatprep.subr.bf16.mxu0 0
    %782 = vmatpush1.bf16.msra.mxu0 %v739
    %783 = vmatprep.subr.bf16.mxu0 0
    %784 = vmatpush1.bf16.msra.mxu0 %v740
    %785 = vmatprep.subr.bf16.mxu0 0
    %786 = vmatpush1.bf16.msra.mxu0 %v741
    %787 = vmatprep.subr.bf16.mxu0 0
    %788 = vmatpush1.bf16.msra.mxu0 %v742
    %789 = vmatprep.subr.bf16.mxu0 0
    %790 = vmatpush1.bf16.msra.mxu0 %v743
    %791 = vmatprep.subr.bf16.mxu0 0
    %792 = vmatpush1.bf16.msra.mxu0 %v744
    %793 = vmatprep.mubr.bf16.mxu0 %v602
    %794 = vmatmul.mubr.bf16.gmra.mrb[0].mxu0 %v601
    %v795 = vpop.f32.mrb[0].mxu0
    %v796 = vadd.f32 0.0, %v795
    %v797 = vpop.f32.mrb[0].mxu0
    %v798 = vpop.f32.mrb[0].mxu0
    %v799 = vadd.f32 0.0, %v798
    %v800 = vpop.f32.mrb[0].mxu0
    %801 = vmatprep.mubr.bf16.mxu0 %v604
    %802 = vmatmul.mubr.bf16.gmra.mrb[0].mxu0 %v603
    %v803 = vpop.f32.mrb[0].mxu0
    %v804 = vadd.f32 0.0, %v803
    %v805 = vpop.f32.mrb[0].mxu0
    %v806 = vpop.f32.mrb[0].mxu0
    %v807 = vadd.f32 0.0, %v806
    %v808 = vpop.f32.mrb[0].mxu0
    %809 = vmatprep.mubr.bf16.mxu0 %v606
    %810 = vmatmul.mubr.bf16.gmra.mrb[0].mxu0 %v605
    %v811 = vpop.f32.mrb[0].mxu0
    %v812 = vadd.f32 0.0, %v811
    %v813 = vpop.f32.mrb[0].mxu0
    %v814 = vpop.f32.mrb[0].mxu0
    %v815 = vadd.f32 0.0, %v814
    %v816 = vpop.f32.mrb[0].mxu0
    %817 = vmatprep.mubr.bf16.mxu0 %v608
    %818 = vmatmul.mubr.bf16.gmra.mrb[0].mxu0 %v607
    %v819 = vpop.f32.mrb[0].mxu0
    %v820 = vadd.f32 0.0, %v819
    %v821 = vpop.f32.mrb[0].mxu0
    %v822 = vpop.f32.mrb[0].mxu0
    %v823 = vadd.f32 0.0, %v822
    %v824 = vpop.f32.mrb[0].mxu0
    %825 = vmatprep.mubr.bf16.mxu0 %v610
    %826 = vmatmul.mubr.bf16.gmra.mrb[0].mxu0 %v609
    %v827 = vpop.f32.mrb[0].mxu0
    %v828 = vadd.f32 0.0, %v827
    %v829 = vpop.f32.mrb[0].mxu0
    %v830 = vpop.f32.mrb[0].mxu0
    %v831 = vadd.f32 0.0, %v830
    %v832 = vpop.f32.mrb[0].mxu0
    %833 = vmatprep.mubr.bf16.mxu0 %v612
    %834 = vmatmul.mubr.bf16.gmra.mrb[0].mxu0 %v611
    %v835 = vpop.f32.mrb[0].mxu0
    %v836 = vadd.f32 0.0, %v835
    %v837 = vpop.f32.mrb[0].mxu0
    %v838 = vpop.f32.mrb[0].mxu0
    %v839 = vadd.f32 0.0, %v838
    %v840 = vpop.f32.mrb[0].mxu0
    %841 = vmatprep.mubr.bf16.mxu0 %v614
    %842 = vmatmul.mubr.bf16.gmra.mrb[0].mxu0 %v613
    %v843 = vpop.f32.mrb[0].mxu0
    %v844 = vadd.f32 0.0, %v843
    %v845 = vpop.f32.mrb[0].mxu0
    %v846 = vpop.f32.mrb[0].mxu0
    %v847 = vadd.f32 0.0, %v846
    %v848 = vpop.f32.mrb[0].mxu0
    %849 = vmatprep.mubr.bf16.mxu0 %v616
    %850 = vmatmul.mubr.bf16.gmra.mrb[0].mxu0 %v615
    %v851 = vpop.f32.mrb[0].mxu0
    %v852 = vadd.f32 0.0, %v851
    %v853 = vpop.f32.mrb[0].mxu0
    %v854 = vpop.f32.mrb[0].mxu0
    %v855 = vadd.f32 0.0, %v854
    %v856 = vpop.f32.mrb[0].mxu0
    %857 = vmatprep.mubr.bf16.mxu0 %v618
    %858 = vmatmul.mubr.bf16.gmra.mrb[0].mxu0 %v617
    %v859 = vpop.f32.mrb[0].mxu0
    %v860 = vadd.f32 0.0, %v859
    %v861 = vpop.f32.mrb[0].mxu0
    %v862 = vpop.f32.mrb[0].mxu0
    %v863 = vadd.f32 0.0, %v862
    %v864 = vpop.f32.mrb[0].mxu0
    %865 = vmatprep.mubr.bf16.mxu0 %v620
    %866 = vmatmul.mubr.bf16.gmra.mrb[0].mxu0 %v619
    %v867 = vpop.f32.mrb[0].mxu0
    %v868 = vadd.f32 0.0, %v867
    %v869 = vpop.f32.mrb[0].mxu0
    %v870 = vpop.f32.mrb[0].mxu0
    %v871 = vadd.f32 0.0, %v870
    %v872 = vpop.f32.mrb[0].mxu0
    %873 = vmatprep.mubr.bf16.mxu0 %v622
    %874 = vmatmul.mubr.bf16.gmra.mrb[0].mxu0 %v621
    %v875 = vpop.f32.mrb[0].mxu0
    %v876 = vadd.f32 0.0, %v875
    %v877 = vpop.f32.mrb[0].mxu0
    %v878 = vpop.f32.mrb[0].mxu0
    %v879 = vadd.f32 0.0, %v878
    %v880 = vpop.f32.mrb[0].mxu0
    %881 = vmatprep.mubr.bf16.mxu0 %v624
    %882 = vmatmul.mubr.bf16.gmra.mrb[0].mxu0 %v623
    %v883 = vpop.f32.mrb[0].mxu0
    %v884 = vadd.f32 0.0, %v883
    %v885 = vpop.f32.mrb[0].mxu0
    %v886 = vpop.f32.mrb[0].mxu0
    %v887 = vadd.f32 0.0, %v886
    %v888 = vpop.f32.mrb[0].mxu0
    %889 = vmatprep.mubr.bf16.mxu0 %v626
    %890 = vmatmul.mubr.bf16.gmra.mrb[0].mxu0 %v625
    %v891 = vpop.f32.mrb[0].mxu0
    %v892 = vadd.f32 0.0, %v891
    %v893 = vpop.f32.mrb[0].mxu0
    %v894 = vpop.f32.mrb[0].mxu0
    %v895 = vadd.f32 0.0, %v894
    %v896 = vpop.f32.mrb[0].mxu0
    %897 = vmatprep.mubr.bf16.mxu0 %v628
    %898 = vmatmul.mubr.bf16.gmra.mrb[0].mxu0 %v627
    %v899 = vpop.f32.mrb[0].mxu0
    %v900 = vadd.f32 0.0, %v899
    %v901 = vpop.f32.mrb[0].mxu0
    %v902 = vpop.f32.mrb[0].mxu0
    %v903 = vadd.f32 0.0, %v902
    %v904 = vpop.f32.mrb[0].mxu0
    %905 = vmatprep.mubr.bf16.mxu0 %v630
    %906 = vmatmul.mubr.bf16.gmra.mrb[0].mxu0 %v629
    %v907 = vpop.f32.mrb[0].mxu0
    %v908 = vadd.f32 0.0, %v907
    %v909 = vpop.f32.mrb[0].mxu0
    %v910 = vpop.f32.mrb[0].mxu0
    %v911 = vadd.f32 0.0, %v910
    %v912 = vpop.f32.mrb[0].mxu0
    %913 = vmatprep.mubr.bf16.mxu0 %v632
    %914 = vmatmul.mubr.bf16.gmra.mrb[0].mxu0 %v631
    %v915 = vpop.f32.mrb[0].mxu0
    %v916 = vadd.f32 0.0, %v915
    %v917 = vpop.f32.mrb[0].mxu0
    %v918 = vpop.f32.mrb[0].mxu0
    %v919 = vadd.f32 0.0, %v918
    %v920 = vpop.f32.mrb[0].mxu0
    %921 = vdwg.mxu0
    %v922 = vmul.f32 %v796, %v796
    %v923 = vmul.f32 %v799, %v799
    %v924 = vmul.f32 %v804, %v804
    %v925 = vmul.f32 %v807, %v807
    %v926 = vmul.f32 %v812, %v812
    %v927 = vmul.f32 %v815, %v815
    %v928 = vmul.f32 %v820, %v820
    %v929 = vmul.f32 %v823, %v823
    %v930 = vmul.f32 %v828, %v828
    %v931 = vmul.f32 %v831, %v831
    %v932 = vmul.f32 %v836, %v836
    %v933 = vmul.f32 %v839, %v839
    %v934 = vmul.f32 %v844, %v844
    %v935 = vmul.f32 %v847, %v847
    %v936 = vmul.f32 %v852, %v852
    %v937 = vmul.f32 %v855, %v855
    %v938 = vmul.f32 %v860, %v860
    %v939 = vmul.f32 %v863, %v863
    %v940 = vmul.f32 %v868, %v868
    %v941 = vmul.f32 %v871, %v871
    %v942 = vmul.f32 %v876, %v876
    %v943 = vmul.f32 %v879, %v879
    %v944 = vmul.f32 %v884, %v884
    %v945 = vmul.f32 %v887, %v887
    %v946 = vmul.f32 %v892, %v892
    %v947 = vmul.f32 %v895, %v895
    %v948 = vmul.f32 %v900, %v900
    %v949 = vmul.f32 %v903, %v903
    %v950 = vmul.f32 %v908, %v908
    %v951 = vmul.f32 %v911, %v911
    %v952 = vmul.f32 %v916, %v916
    %v953 = vmul.f32 %v919, %v919
    %954 = vadd.xlane.f32.xlu0 %v922
    %v955 = vpop.xlane.xlu0 %954
    %956 = vadd.xlane.f32.xlu0 %v923
    %v957 = vpop.xlane.xlu0 %956
    %958 = vadd.xlane.f32.xlu0 %v924
    %v959 = vpop.xlane.xlu0 %958
    %960 = vadd.xlane.f32.xlu0 %v925
    %v961 = vpop.xlane.xlu0 %960
    %962 = vadd.xlane.f32.xlu0 %v926
    %v963 = vpop.xlane.xlu0 %962
    %964 = vadd.xlane.f32.xlu0 %v927
    %v965 = vpop.xlane.xlu0 %964
    %966 = vadd.xlane.f32.xlu0 %v928
    %v967 = vpop.xlane.xlu0 %966
    %968 = vadd.xlane.f32.xlu0 %v929
    %v969 = vpop.xlane.xlu0 %968
    %970 = vadd.xlane.f32.xlu0 %v930
    %v971 = vpop.xlane.xlu0 %970
    %972 = vadd.xlane.f32.xlu0 %v931
    %v973 = vpop.xlane.xlu0 %972
    %974 = vadd.xlane.f32.xlu0 %v932
    %v975 = vpop.xlane.xlu0 %974
    %976 = vadd.xlane.f32.xlu0 %v933
    %v977 = vpop.xlane.xlu0 %976
    %978 = vadd.xlane.f32.xlu0 %v934
    %v979 = vpop.xlane.xlu0 %978
    %980 = vadd.xlane.f32.xlu0 %v935
    %v981 = vpop.xlane.xlu0 %980
    %982 = vadd.xlane.f32.xlu0 %v936
    %v983 = vpop.xlane.xlu0 %982
    %984 = vadd.xlane.f32.xlu0 %v937
    %v985 = vpop.xlane.xlu0 %984
    %986 = vadd.xlane.f32.xlu0 %v938
    %v987 = vpop.xlane.xlu0 %986
    %988 = vadd.xlane.f32.xlu0 %v939
    %v989 = vpop.xlane.xlu0 %988
    %990 = vadd.xlane.f32.xlu0 %v940
    %v991 = vpop.xlane.xlu0 %990
    %992 = vadd.xlane.f32.xlu0 %v941
    %v993 = vpop.xlane.xlu0 %992
    %994 = vadd.xlane.f32.xlu0 %v942
    %v995 = vpop.xlane.xlu0 %994
    %996 = vadd.xlane.f32.xlu0 %v943
    %v997 = vpop.xlane.xlu0 %996
    %998 = vadd.xlane.f32.xlu0 %v944
    %v999 = vpop.xlane.xlu0 %998
    %1000 = vadd.xlane.f32.xlu0 %v945
    %v1001 = vpop.xlane.xlu0 %1000
    %1002 = vadd.xlane.f32.xlu0 %v946
    %v1003 = vpop.xlane.xlu0 %1002
    %1004 = vadd.xlane.f32.xlu0 %v947
    %v1005 = vpop.xlane.xlu0 %1004
    %1006 = vadd.xlane.f32.xlu0 %v948
    %v1007 = vpop.xlane.xlu0 %1006
    %1008 = vadd.xlane.f32.xlu0 %v949
    %v1009 = vpop.xlane.xlu0 %1008
    %1010 = vadd.xlane.f32.xlu0 %v950
    %v1011 = vpop.xlane.xlu0 %1010
    %1012 = vadd.xlane.f32.xlu0 %v951
    %v1013 = vpop.xlane.xlu0 %1012
    %1014 = vadd.xlane.f32.xlu0 %v952
    %v1015 = vpop.xlane.xlu0 %1014
    %1016 = vadd.xlane.f32.xlu0 %v953
    %v1017 = vpop.xlane.xlu0 %1016
    %v1018 = vmax.f32 %v955, 1e-24
    %v1019 = vmax.f32 %v957, 1e-24
    %v1020 = vmax.f32 %v959, 1e-24
    %v1021 = vmax.f32 %v961, 1e-24
    %v1022 = vmax.f32 %v963, 1e-24
    %v1023 = vmax.f32 %v965, 1e-24
    %v1024 = vmax.f32 %v967, 1e-24
    %v1025 = vmax.f32 %v969, 1e-24
    %v1026 = vmax.f32 %v971, 1e-24
    %v1027 = vmax.f32 %v973, 1e-24
    %v1028 = vmax.f32 %v975, 1e-24
    %v1029 = vmax.f32 %v977, 1e-24
    %v1030 = vmax.f32 %v979, 1e-24
    %v1031 = vmax.f32 %v981, 1e-24
    %v1032 = vmax.f32 %v983, 1e-24
    %v1033 = vmax.f32 %v985, 1e-24
    %v1034 = vmax.f32 %v987, 1e-24
    %v1035 = vmax.f32 %v989, 1e-24
    %v1036 = vmax.f32 %v991, 1e-24
    %v1037 = vmax.f32 %v993, 1e-24
    %v1038 = vmax.f32 %v995, 1e-24
    %v1039 = vmax.f32 %v997, 1e-24
    %v1040 = vmax.f32 %v999, 1e-24
    %v1041 = vmax.f32 %v1001, 1e-24
    %v1042 = vmax.f32 %v1003, 1e-24
    %v1043 = vmax.f32 %v1005, 1e-24
    %v1044 = vmax.f32 %v1007, 1e-24
    %v1045 = vmax.f32 %v1009, 1e-24
    %v1046 = vmax.f32 %v1011, 1e-24
    %v1047 = vmax.f32 %v1013, 1e-24
    %v1048 = vmax.f32 %v1015, 1e-24
    %v1049 = vmax.f32 %v1017, 1e-24
    %v1050 = vrsqrt.pop %v1018
    %v1051 = vrsqrt.pop %v1019
    %v1052 = vrsqrt.pop %v1020
    %v1053 = vrsqrt.pop %v1021
    %v1054 = vrsqrt.pop %v1022
    %v1055 = vrsqrt.pop %v1023
    %v1056 = vrsqrt.pop %v1024
    %v1057 = vrsqrt.pop %v1025
    %v1058 = vrsqrt.pop %v1026
    %v1059 = vrsqrt.pop %v1027
    %v1060 = vrsqrt.pop %v1028
    %v1061 = vrsqrt.pop %v1029
    %v1062 = vrsqrt.pop %v1030
    %v1063 = vrsqrt.pop %v1031
    %v1064 = vrsqrt.pop %v1032
    %v1065 = vrsqrt.pop %v1033
    %v1066 = vrsqrt.pop %v1034
    %v1067 = vrsqrt.pop %v1035
    %v1068 = vrsqrt.pop %v1036
    %v1069 = vrsqrt.pop %v1037
    %v1070 = vrsqrt.pop %v1038
    %v1071 = vrsqrt.pop %v1039
    %v1072 = vrsqrt.pop %v1040
    %v1073 = vrsqrt.pop %v1041
    %v1074 = vrsqrt.pop %v1042
    %v1075 = vrsqrt.pop %v1043
    %v1076 = vrsqrt.pop %v1044
    %v1077 = vrsqrt.pop %v1045
    %v1078 = vrsqrt.pop %v1046
    %v1079 = vrsqrt.pop %v1047
    %v1080 = vrsqrt.pop %v1048
    %v1081 = vrsqrt.pop %v1049
    %v1082 = vmul.f32 %v796, %v1050
    %v1083 = vmul.f32 %v799, %v1051
    %v1084 = vmul.f32 %v804, %v1052
    %v1085 = vmul.f32 %v807, %v1053
    %v1086 = vmul.f32 %v812, %v1054
    %v1087 = vmul.f32 %v815, %v1055
    %v1088 = vmul.f32 %v820, %v1056
    %v1089 = vmul.f32 %v823, %v1057
    %v1090 = vmul.f32 %v828, %v1058
    %v1091 = vmul.f32 %v831, %v1059
    %v1092 = vmul.f32 %v836, %v1060
    %v1093 = vmul.f32 %v839, %v1061
    %v1094 = vmul.f32 %v844, %v1062
    %v1095 = vmul.f32 %v847, %v1063
    %v1096 = vmul.f32 %v852, %v1064
    %v1097 = vmul.f32 %v855, %v1065
    %v1098 = vmul.f32 %v860, %v1066
    %v1099 = vmul.f32 %v863, %v1067
    %v1100 = vmul.f32 %v868, %v1068
    %v1101 = vmul.f32 %v871, %v1069
    %v1102 = vmul.f32 %v876, %v1070
    %v1103 = vmul.f32 %v879, %v1071
    %v1104 = vmul.f32 %v884, %v1072
    %v1105 = vmul.f32 %v887, %v1073
    %v1106 = vmul.f32 %v892, %v1074
    %v1107 = vmul.f32 %v895, %v1075
    %v1108 = vmul.f32 %v900, %v1076
    %v1109 = vmul.f32 %v903, %v1077
    %v1110 = vmul.f32 %v908, %v1078
    %v1111 = vmul.f32 %v911, %v1079
    %v1112 = vmul.f32 %v916, %v1080
    %v1113 = vmul.f32 %v919, %v1081
    %1114 = vst [vmem:[#allocation8] sm:$0xff] %v1082
    %1115 = vst [vmem:[#allocation8 + $0x8] sm:$0xff] %v1083
    %1116 = vst [vmem:[#allocation8 + $0x10] sm:$0xff] %v1084
    %1117 = vst [vmem:[#allocation8 + $0x18] sm:$0xff] %v1085
    %1118 = vst [vmem:[#allocation8 + $0x20] sm:$0xff] %v1086
    %1119 = vst [vmem:[#allocation8 + $0x28] sm:$0xff] %v1087
    %1120 = vst [vmem:[#allocation8 + $0x30] sm:$0xff] %v1088
    %1121 = vst [vmem:[#allocation8 + $0x38] sm:$0xff] %v1089
    %1122 = vst [vmem:[#allocation8 + $0x40] sm:$0xff] %v1090
    %1123 = vst [vmem:[#allocation8 + $0x48] sm:$0xff] %v1091
    %1124 = vst [vmem:[#allocation8 + $0x50] sm:$0xff] %v1092
    %1125 = vst [vmem:[#allocation8 + $0x58] sm:$0xff] %v1093
    %1126 = vst [vmem:[#allocation8 + $0x60] sm:$0xff] %v1094
    %1127 = vst [vmem:[#allocation8 + $0x68] sm:$0xff] %v1095
    %1128 = vst [vmem:[#allocation8 + $0x70] sm:$0xff] %v1096
    %1129 = vst [vmem:[#allocation8 + $0x78] sm:$0xff] %v1097
    %1130 = vst [vmem:[#allocation8 + $0x80] sm:$0xff] %v1098
    %1131 = vst [vmem:[#allocation8 + $0x88] sm:$0xff] %v1099
    %1132 = vst [vmem:[#allocation8 + $0x90] sm:$0xff] %v1100
    %1133 = vst [vmem:[#allocation8 + $0x98] sm:$0xff] %v1101
    %1134 = vst [vmem:[#allocation8 + $0xa0] sm:$0xff] %v1102
    %1135 = vst [vmem:[#allocation8 + $0xa8] sm:$0xff] %v1103
    %1136 = vst [vmem:[#allocation8 + $0xb0] sm:$0xff] %v1104
    %1137 = vst [vmem:[#allocation8 + $0xb8] sm:$0xff] %v1105
    %1138 = vst [vmem:[#allocation8 + $0xc0] sm:$0xff] %v1106
    %1139 = vst [vmem:[#allocation8 + $0xc8] sm:$0xff] %v1107
    %1140 = vst [vmem:[#allocation8 + $0xd0] sm:$0xff] %v1108
    %1141 = vst [vmem:[#allocation8 + $0xd8] sm:$0xff] %v1109
    %1142 = vst [vmem:[#allocation8 + $0xe0] sm:$0xff] %v1110
    %1143 = vst [vmem:[#allocation8 + $0xe8] sm:$0xff] %v1111
    %1144 = vst [vmem:[#allocation8 + $0xf0] sm:$0xff] %v1112
    %1145 = vst [vmem:[#allocation8 + $0xf8] sm:$0xff] %v1113
    // Predicated region
    $region30: #{tpu_custom_call.1} parent=1 // pred_check
      _
    $region31: #{tpu_custom_call.1} parent=1 // pred_check_branch
      %1147 = sbr.rel (0) target = $region33
    $region32: #{tpu_custom_call.1} parent=1 // pred_region
      %s1149 = ssub.s32 4096, 4096
      %1150 = vsyncadd [#allocation4], %s1149
      %s1151 = sshll.u32 [#allocation8], 4
      %s1152 = int_to_ptr.vmem [resolvable:$true] %s1151
      %1157 = dma.vmem_to_hbm [thread:$0]  %s1152, 4096, %s4, [#allocation4], 128, 128, 8
    $region33: #{tpu_custom_call.1} parent=1 // pred_fallthru
      _
    // Predicated region
    $region34: #{tpu_custom_call.1} parent=1 // pred_check
      _
    $region35: #{tpu_custom_call.1} parent=1 // pred_check_branch
      %1159 = sbr.rel (0) target = $region37
    $region36: #{tpu_custom_call.1} parent=1 // pred_region
      %1160 = dma.done [#allocation4], 4096
    $region37: #{tpu_custom_call.1} parent=1 // pred_fallthru
      _
    %1161 = vsyncpa [#allocation3], 1
    %1162 = vsyncpa [#allocation6], 1
    %1163 = vsyncpa [#allocation4], 1

</llo_original>
